<compile_context>
chip_gen: v5e
topology: v5e:2x2
jax: 0.10.0
libtpu: 0.0.40
codegen_flags: <defaults>
</compile_context>

<pallas_src>
import numpy as np
import jax
import jax.numpy as jnp
from jax.experimental import pallas as pl
from jax.experimental.pallas import tpu as pltpu

# --------------------------- model config -----------------------------------
N_NODES = 64       # number of graph nodes per graph
IN_CH = 16         # in_channels
HID_CH = 32        # hidden_channels
OUT_CH = 8         # out_channels
OUT_PAD = 128      # lane-dense padded output width (>= OUT_CH, multiple of 128)
K = 10             # GPR propagation steps
ALPHA = 0.1        # PPR teleport prob
N_GRAPHS = 4       # graphs batched per pallas_call (grid axis, "parallel")
# dropout / dprate are identity in eval mode (training=False)


def make_gprgnn_kernel(k_steps: int, out_pad: int):
    """One grid step = one graph (refs arrive with the batch dim squeezed)."""

    def kernel(temp_ref, x_ref, w1_ref, b1_ref, w2_ref, b2_ref, a_ref, o_ref):
        # Hoist all gamma scalar reads (SMEM) off the MXU dependency chain.
        gammas = [temp_ref[i] for i in range(k_steps + 1)]

        a = a_ref[...]                                     # bf16 [N, N]

        # lin1 + ReLU  (W1 pre-transposed to [in, hidden]); bf16 in, f32 acc.
        h = jnp.dot(x_ref[...], w1_ref[...],
                    preferred_element_type=jnp.float32) + b1_ref[...]
        h = jnp.maximum(h, 0.0)

        # lin2 (W2 pre-transposed and zero-padded to [hidden, OUT_PAD]).
        # Invariant: columns OUT_CH..OUT_PAD-1 of w2_ref / b2_ref are exactly
        # zero, so the padded output columns stay exactly zero end-to-end.
        z0 = jnp.dot(h.astype(jnp.bfloat16), w2_ref[...],
                     preferred_element_type=jnp.float32) + b2_ref[...]

        hidden = gammas[0] * z0                            # f32 accumulator

        if k_steps >= 1:
            z1 = jnp.dot(a, z0.astype(jnp.bfloat16),
                         preferred_element_type=jnp.float32)
            hidden = hidden + gammas[1] * z1

        if k_steps >= 2:
            # A^2 is independent of the z-chain (overlaps with the z1 matmul).
            a2 = jnp.dot(a, a, preferred_element_type=jnp.float32
                         ).astype(jnp.bfloat16)            # bf16 [N, N]
            # 256-lane paired operand: [z_even | z_odd].
            w = jnp.concatenate([z0, z1], axis=1).astype(jnp.bfloat16)
            n_pairs = k_steps // 2
            for j in range(1, n_pairs + 1):                # static -> unrolled
                wf = jnp.dot(a2, w, preferred_element_type=jnp.float32)
                hidden = hidden + gammas[2 * j] * wf[:, :out_pad]
                if 2 * j + 1 <= k_steps:
                    hidden = hidden + gammas[2 * j + 1] * wf[:, out_pad:]
                if j < n_pairs:
                    w = wf.astype(jnp.bfloat16)

        o_ref[...] = hidden                                # lane-dense [N, 128]

    return kernel


def gprgnn_forward(temp, x, w1t, b1, w2t, b2, a_hat, k_steps):
    """Batched GPRGNN forward.

    temp: f32[K+1]; x: bf16[B,N,in]; w1t: bf16[in,hid]; b1: f32[1,hid];
    w2t: bf16[hid,OUT_PAD] (cols >= OUT_CH zero); b2: f32[1,OUT_PAD] (same);
    a_hat: bf16[B,N,N].
    Returns the padded f32[B,N,OUT_PAD] hidden; columns OUT_CH.. are exactly 0.
    Consumers should index the padded buffer lazily (no separate slice op).
    """
    batch, n, in_ch = x.shape
    hid_ch = w1t.shape[1]
    out_pad = w2t.shape[1]

    # Honest scheduler hint (real feature width OUT_CH, one-time A@A counted).
    n_pairs = k_steps // 2 if k_steps >= 2 else 0
    flops_per_graph = 2 * (n * in_ch * hid_ch
                           + n * hid_ch * OUT_CH
                           + (n * n * OUT_CH if k_steps >= 1 else 0)
                           + (n * n * n if k_steps >= 2 else 0)
                           + n_pairs * n * n * 2 * OUT_CH)
    flops = batch * flops_per_graph
    bytes_accessed = (temp.size * 4 + x.size * 2 + w1t.size * 2 + b1.size * 4
                      + w2t.size * 2 + b2.size * 4 + a_hat.size * 2
                      + batch * n * out_pad * 4)

    smem = pltpu.MemorySpace.SMEM
    grid_spec = pltpu.PrefetchScalarGridSpec(
        num_scalar_prefetch=0,
        grid=(batch,),
        in_specs=[
            # temp: (K+1,) f32 scalars, kept in SMEM, same block every step.
            pl.BlockSpec((k_steps + 1,), lambda b: (0,), memory_space=smem),
            # per-graph node features / adjacency: batch dim squeezed away.
            pl.BlockSpec((pl.Squeezed(), n, in_ch), lambda b: (b, 0, 0)),
            # shared weights: constant block index -> stays resident in VMEM.
            pl.BlockSpec((in_ch, hid_ch), lambda b: (0, 0)),
            pl.BlockSpec((1, hid_ch), lambda b: (0, 0)),
            pl.BlockSpec((hid_ch, out_pad), lambda b: (0, 0)),
            pl.BlockSpec((1, out_pad), lambda b: (0, 0)),
            pl.BlockSpec((pl.Squeezed(), n, n), lambda b: (b, 0, 0)),
        ],
        out_specs=pl.BlockSpec((pl.Squeezed(), n, out_pad),
                               lambda b: (b, 0, 0)),
    )

    return pl.pallas_call(
        make_gprgnn_kernel(k_steps, out_pad),
        out_shape=jax.ShapeDtypeStruct((batch, n, out_pad), jnp.float32),
        grid_spec=grid_spec,
        compiler_params=pltpu.CompilerParams(
            dimension_semantics=("parallel",)),
        cost_estimate=pl.CostEstimate(flops=flops, transcendentals=0,
                                      bytes_accessed=bytes_accessed),
    )(temp, x, w1t, b1, w2t, b2, a_hat)


# ---------------------- glue: gcn_norm (dense) -------------------------------
def gcn_norm_dense(adj):
    """A_hat = D^{-1/2} (A + I) D^{-1/2}, edge weights = 1."""
    n = adj.shape[0]
    a_tilde = adj + jnp.eye(n, dtype=adj.dtype)
    deg = jnp.sum(a_tilde, axis=1)
    d_inv_sqrt = jnp.where(deg > 0, 1.0 / jnp.sqrt(deg), 0.0)
    return a_tilde * d_inv_sqrt[:, None] * d_inv_sqrt[None, :]


# ---------------------- pure-JAX references (single graph) -------------------
def reference_forward_f32(temp, x, w1t, b1, w2t, b2, a_hat, k_steps):
    """Original-module semantics (eval mode), full f32 math."""
    h = jnp.maximum(x @ w1t + b1, 0.0)
    z = h @ w2t + b2
    hidden = temp[0] * z
    for k in range(k_steps):
        z = a_hat @ z
        hidden = hidden + temp[k + 1] * z
    return hidden


def reference_forward_bf16(temp, x_bf, w1t_bf, b1, w2t_bf, b2, a_bf, k_steps):
    """Exact paired-parity bf16-operand / f32-accumulate recipe of the kernel
    (keep in sync with make_gprgnn_kernel)."""
    out_pad = w2t_bf.shape[1]
    h = jnp.maximum(jnp.dot(x_bf, w1t_bf,
                            preferred_element_type=jnp.float32) + b1, 0.0)
    z0 = jnp.dot(h.astype(jnp.bfloat16), w2t_bf,
                 preferred_element_type=jnp.float32) + b2
    hidden = temp[0] * z0
    if k_steps >= 1:
        z1 = jnp.dot(a_bf, z0.astype(jnp.bfloat16),
                     preferred_element_type=jnp.float32)
        hidden = hidden + temp[1] * z1
    if k_steps >= 2:
        a2 = jnp.dot(a_bf, a_bf,
                     preferred_element_type=jnp.float32).astype(jnp.bfloat16)
        w = jnp.concatenate([z0, z1], axis=1).astype(jnp.bfloat16)
        n_pairs = k_steps // 2
        for j in range(1, n_pairs + 1):
            wf = jnp.dot(a2, w, preferred_element_type=jnp.float32)
            hidden = hidden + temp[2 * j] * wf[:, :out_pad]
            if 2 * j + 1 <= k_steps:
                hidden = hidden + temp[2 * j + 1] * wf[:, out_pad:]
            if j < n_pairs:
                w = wf.astype(jnp.bfloat16)
    return hidden


if __name__ == "__main__":
    key = jax.random.PRNGKey(0)
    k_x, k_w1, k_b1, k_w2, k_b2, k_edges = jax.random.split(key, 6)

    # node features for a batch of graphs
    x = jax.random.normal(k_x, (N_GRAPHS, N_NODES, IN_CH), dtype=jnp.float32)

    # Linear params (PyTorch-style uniform init, deterministic, shared)
    lim1 = 1.0 / np.sqrt(IN_CH)
    w1 = jax.random.uniform(k_w1, (HID_CH, IN_CH), jnp.float32, -lim1, lim1)
    b1 = jax.random.uniform(k_b1, (HID_CH,), jnp.float32, -lim1, lim1)
    lim2 = 1.0 / np.sqrt(HID_CH)
    w2 = jax.random.uniform(k_w2, (OUT_CH, HID_CH), jnp.float32, -lim2, lim2)
    b2 = jax.random.uniform(k_b2, (OUT_CH,), jnp.float32, -lim2, lim2)

    # PPR init of gamma coefficients (GPR_prop, Init='PPR')
    temp_np = ALPHA * (1.0 - ALPHA) ** np.arange(K + 1)
    temp_np[-1] = (1.0 - ALPHA) ** K
    temp = jnp.asarray(temp_np, dtype=jnp.float32)

    # deterministic random edge_index per graph -> symmetric dense adjacency
    n_edges = 256
    a_hats = []
    for kg in jax.random.split(k_edges, N_GRAPHS):
        ks, kd = jax.random.split(kg)
        src = jax.random.randint(ks, (n_edges,), 0, N_NODES)
        dst = jax.random.randint(kd, (n_edges,), 0, N_NODES)
        adj = jnp.zeros((N_NODES, N_NODES), jnp.float32)
        adj = adj.at[src, dst].set(1.0)
        adj = adj.at[dst, src].set(1.0)
        adj = adj * (1.0 - jnp.eye(N_NODES, dtype=jnp.float32))  # no self loops
        a_hats.append(gcn_norm_dense(adj))
    a_hat = jnp.stack(a_hats)                              # [B, N, N]

    # pre-transpose weights; zero-pad the propagated feature axis to OUT_PAD
    # lanes (invariant: padded columns of w2t/b2 are EXACTLY zero).
    w1t = w1.T                                             # [in, hidden]
    w2t = w2.T                                             # [hidden, out]
    w2t_pad = jnp.zeros((HID_CH, OUT_PAD), jnp.float32).at[:, :OUT_CH].set(w2t)
    b1r = b1.reshape(1, HID_CH)
    b2r_pad = jnp.zeros((1, OUT_PAD), jnp.float32).at[:, :OUT_CH].set(
        b2.reshape(1, OUT_CH))

    # bf16 MXU operands (biases / gammas / accumulation stay f32)
    x_bf = x.astype(jnp.bfloat16)
    w1t_bf = w1t.astype(jnp.bfloat16)
    w2t_bf = w2t_pad.astype(jnp.bfloat16)
    a_bf = a_hat.astype(jnp.bfloat16)

    out_padded = gprgnn_forward(temp, x_bf, w1t_bf, b1r, w2t_bf, b2r_pad,
                                a_bf, K)
    out_padded = jax.block_until_ready(out_padded)         # [B, N, OUT_PAD]

    # Verification-only host-side slice (consumers should use the padded
    # buffer directly; cols OUT_CH.. are exactly zero).
    out_padded_np = np.asarray(out_padded)
    out = out_padded_np[:, :, :OUT_CH]

    # 1) matches a pure-JAX run of the identical bf16 paired-parity recipe
    ref_bf = np.stack([
        np.asarray(reference_forward_bf16(temp, x_bf[g], w1t_bf, b1r, w2t_bf,
                                          b2r_pad, a_bf[g], K)[:, :OUT_CH])
        for g in range(N_GRAPHS)])
    # 2) matches the original f32 module semantics within bf16 operand precision
    ref_f32 = np.stack([
        np.asarray(reference_forward_f32(temp, x[g], w1t, b1r, w2t,
                                         b2.reshape(1, OUT_CH), a_hat[g], K))
        for g in range(N_GRAPHS)])

    assert out.shape == (N_GRAPHS, N_NODES, OUT_CH)
    assert np.allclose(out, ref_bf, atol=2e-3, rtol=2e-3)
    assert np.allclose(out, ref_f32, atol=5e-2, rtol=5e-2)
    # padded columns must stay exactly zero (w2t/b2 zero-padding invariant)
    assert np.all(out_padded_np[:, :, OUT_CH:] == 0.0)

    print("KERNEL_OK")
</pallas_src>

<mosaic_0001>
module attributes {stable_mosaic.version = 11 : i64} {
  func.func @kernel(%arg0: i32, %arg1: memref<11xf32, #tpu.memory_space<smem>>, %arg2: memref<1x64x16xbf16, #tpu.memory_space<vmem>>, %arg3: memref<16x32xbf16, #tpu.memory_space<vmem>>, %arg4: memref<1x32xf32, #tpu.memory_space<vmem>>, %arg5: memref<32x128xbf16, #tpu.memory_space<vmem>>, %arg6: memref<1x128xf32, #tpu.memory_space<vmem>>, %arg7: memref<1x64x64xbf16, #tpu.memory_space<vmem>>, %arg8: memref<1x64x128xf32, #tpu.memory_space<vmem>>) attributes {dimension_semantics = [#tpu.dimension_semantics<parallel>], iteration_bounds = array<i64: 4>, scalar_prefetch = 0 : i64, scratch_operands = 0 : i64, tpu.core_type = #tpu.core_type<tc>, window_params = [{transform_indices = @transform_0, window_bounds = array<i64: 11>}, {transform_indices = @transform_1, window_bounds = array<i64: 1, 64, 16>}, {pipeline_mode = #tpu.pipeline_mode<synchronous>, transform_indices = @transform_2, window_bounds = array<i64: 16, 32>}, {pipeline_mode = #tpu.pipeline_mode<synchronous>, transform_indices = @transform_3, window_bounds = array<i64: 1, 32>}, {pipeline_mode = #tpu.pipeline_mode<synchronous>, transform_indices = @transform_4, window_bounds = array<i64: 32, 128>}, {pipeline_mode = #tpu.pipeline_mode<synchronous>, transform_indices = @transform_5, window_bounds = array<i64: 1, 128>}, {transform_indices = @transform_6, window_bounds = array<i64: 1, 64, 64>}, {transform_indices = @transform_7, window_bounds = array<i64: 1, 64, 128>}]} {
    %c0 = arith.constant 0 : index
    %0 = memref.load %arg1[%c0] : memref<11xf32, #tpu.memory_space<smem>>
    %c1 = arith.constant 1 : index
    %1 = memref.load %arg1[%c1] : memref<11xf32, #tpu.memory_space<smem>>
    %c2 = arith.constant 2 : index
    %2 = memref.load %arg1[%c2] : memref<11xf32, #tpu.memory_space<smem>>
    %c3 = arith.constant 3 : index
    %3 = memref.load %arg1[%c3] : memref<11xf32, #tpu.memory_space<smem>>
    %c4 = arith.constant 4 : index
    %4 = memref.load %arg1[%c4] : memref<11xf32, #tpu.memory_space<smem>>
    %c5 = arith.constant 5 : index
    %5 = memref.load %arg1[%c5] : memref<11xf32, #tpu.memory_space<smem>>
    %c6 = arith.constant 6 : index
    %6 = memref.load %arg1[%c6] : memref<11xf32, #tpu.memory_space<smem>>
    %c7 = arith.constant 7 : index
    %7 = memref.load %arg1[%c7] : memref<11xf32, #tpu.memory_space<smem>>
    %c8 = arith.constant 8 : index
    %8 = memref.load %arg1[%c8] : memref<11xf32, #tpu.memory_space<smem>>
    %c9 = arith.constant 9 : index
    %9 = memref.load %arg1[%c9] : memref<11xf32, #tpu.memory_space<smem>>
    %c10 = arith.constant 10 : index
    %10 = memref.load %arg1[%c10] : memref<11xf32, #tpu.memory_space<smem>>
    %c0_0 = arith.constant 0 : index
    %c0_1 = arith.constant 0 : index
    %c0_2 = arith.constant 0 : index
    %11 = vector.load %arg7[%c0_0, %c0_1, %c0_2] : memref<1x64x64xbf16, #tpu.memory_space<vmem>>, vector<1x64x64xbf16>
    %12 = vector.shape_cast %11 : vector<1x64x64xbf16> to vector<64x64xbf16>
    %c0_3 = arith.constant 0 : index
    %c0_4 = arith.constant 0 : index
    %c0_5 = arith.constant 0 : index
    %13 = vector.load %arg2[%c0_3, %c0_4, %c0_5] : memref<1x64x16xbf16, #tpu.memory_space<vmem>>, vector<1x64x16xbf16>
    %14 = vector.shape_cast %13 : vector<1x64x16xbf16> to vector<64x16xbf16>
    %c0_6 = arith.constant 0 : index
    %c0_7 = arith.constant 0 : index
    %15 = vector.load %arg3[%c0_6, %c0_7] : memref<16x32xbf16, #tpu.memory_space<vmem>>, vector<16x32xbf16>
    %cst = arith.constant dense<0.000000e+00> : vector<64x32xf32>
    %16 = tpu.matmul %14, %15, %cst {dimension_numbers = #tpu.dot_dimension_numbers<[1], [0], [0], [1], [0, 0, 1, 1], [], []>} : vector<64x16xbf16>, vector<16x32xbf16>, vector<64x32xf32> -> vector<64x32xf32>
    %c0_8 = arith.constant 0 : index
    %c0_9 = arith.constant 0 : index
    %17 = vector.load %arg4[%c0_8, %c0_9] : memref<1x32xf32, #tpu.memory_space<vmem>>, vector<1x32xf32>
    %18 = vector.broadcast %17 : vector<1x32xf32> to vector<64x32xf32>
    %19 = arith.addf %16, %18 : vector<64x32xf32>
    %cst_10 = arith.constant 0.000000e+00 : f32
    %20 = vector.broadcast %cst_10 : f32 to vector<64x32xf32>
    %21 = arith.maximumf %19, %20 : vector<64x32xf32>
    %22 = arith.truncf %21 : vector<64x32xf32> to vector<64x32xbf16>
    %c0_11 = arith.constant 0 : index
    %c0_12 = arith.constant 0 : index
    %23 = vector.load %arg5[%c0_11, %c0_12] : memref<32x128xbf16, #tpu.memory_space<vmem>>, vector<32x128xbf16>
    %cst_13 = arith.constant dense<0.000000e+00> : vector<64x128xf32>
    %24 = tpu.matmul %22, %23, %cst_13 {dimension_numbers = #tpu.dot_dimension_numbers<[1], [0], [0], [1], [0, 0, 1, 1], [], []>} : vector<64x32xbf16>, vector<32x128xbf16>, vector<64x128xf32> -> vector<64x128xf32>
    %c0_14 = arith.constant 0 : index
    %c0_15 = arith.constant 0 : index
    %25 = vector.load %arg6[%c0_14, %c0_15] : memref<1x128xf32, #tpu.memory_space<vmem>>, vector<1x128xf32>
    %26 = vector.broadcast %25 : vector<1x128xf32> to vector<64x128xf32>
    %27 = arith.addf %24, %26 : vector<64x128xf32>
    %28 = vector.broadcast %0 : f32 to vector<64x128xf32>
    %29 = arith.mulf %28, %27 : vector<64x128xf32>
    %30 = arith.truncf %27 : vector<64x128xf32> to vector<64x128xbf16>
    %cst_16 = arith.constant dense<0.000000e+00> : vector<64x128xf32>
    %31 = tpu.matmul %12, %30, %cst_16 {dimension_numbers = #tpu.dot_dimension_numbers<[1], [0], [0], [1], [0, 0, 1, 1], [], []>} : vector<64x64xbf16>, vector<64x128xbf16>, vector<64x128xf32> -> vector<64x128xf32>
    %32 = vector.broadcast %1 : f32 to vector<64x128xf32>
    %33 = arith.mulf %32, %31 : vector<64x128xf32>
    %34 = arith.addf %29, %33 : vector<64x128xf32>
    %cst_17 = arith.constant dense<0.000000e+00> : vector<64x64xf32>
    %35 = tpu.matmul %12, %12, %cst_17 {dimension_numbers = #tpu.dot_dimension_numbers<[1], [0], [0], [1], [0, 0, 1, 1], [], []>} : vector<64x64xbf16>, vector<64x64xbf16>, vector<64x64xf32> -> vector<64x64xf32>
    %36 = arith.truncf %35 : vector<64x64xf32> to vector<64x64xbf16>
    %37 = tpu.concatenate %27, %31 in 1 : vector<64x128xf32>, vector<64x128xf32> -> vector<64x256xf32>
    %38 = arith.truncf %37 : vector<64x256xf32> to vector<64x256xbf16>
    %cst_18 = arith.constant dense<0.000000e+00> : vector<64x256xf32>
    %39 = tpu.matmul %36, %38, %cst_18 {dimension_numbers = #tpu.dot_dimension_numbers<[1], [0], [0], [1], [0, 0, 1, 1], [], []>} : vector<64x64xbf16>, vector<64x256xbf16>, vector<64x256xf32> -> vector<64x256xf32>
    %40 = vector.extract_strided_slice %39 {offsets = [0, 0], sizes = [64, 128], strides = [1, 1]} : vector<64x256xf32> to vector<64x128xf32>
    %41 = vector.broadcast %2 : f32 to vector<64x128xf32>
    %42 = arith.mulf %41, %40 : vector<64x128xf32>
    %43 = arith.addf %34, %42 : vector<64x128xf32>
    %44 = vector.extract_strided_slice %39 {offsets = [0, 128], sizes = [64, 128], strides = [1, 1]} : vector<64x256xf32> to vector<64x128xf32>
    %45 = vector.broadcast %3 : f32 to vector<64x128xf32>
    %46 = arith.mulf %45, %44 : vector<64x128xf32>
    %47 = arith.addf %43, %46 : vector<64x128xf32>
    %48 = arith.truncf %39 : vector<64x256xf32> to vector<64x256xbf16>
    %cst_19 = arith.constant dense<0.000000e+00> : vector<64x256xf32>
    %49 = tpu.matmul %36, %48, %cst_19 {dimension_numbers = #tpu.dot_dimension_numbers<[1], [0], [0], [1], [0, 0, 1, 1], [], []>} : vector<64x64xbf16>, vector<64x256xbf16>, vector<64x256xf32> -> vector<64x256xf32>
    %50 = vector.extract_strided_slice %49 {offsets = [0, 0], sizes = [64, 128], strides = [1, 1]} : vector<64x256xf32> to vector<64x128xf32>
    %51 = vector.broadcast %4 : f32 to vector<64x128xf32>
    %52 = arith.mulf %51, %50 : vector<64x128xf32>
    %53 = arith.addf %47, %52 : vector<64x128xf32>
    %54 = vector.extract_strided_slice %49 {offsets = [0, 128], sizes = [64, 128], strides = [1, 1]} : vector<64x256xf32> to vector<64x128xf32>
    %55 = vector.broadcast %5 : f32 to vector<64x128xf32>
    %56 = arith.mulf %55, %54 : vector<64x128xf32>
    %57 = arith.addf %53, %56 : vector<64x128xf32>
    %58 = arith.truncf %49 : vector<64x256xf32> to vector<64x256xbf16>
    %cst_20 = arith.constant dense<0.000000e+00> : vector<64x256xf32>
    %59 = tpu.matmul %36, %58, %cst_20 {dimension_numbers = #tpu.dot_dimension_numbers<[1], [0], [0], [1], [0, 0, 1, 1], [], []>} : vector<64x64xbf16>, vector<64x256xbf16>, vector<64x256xf32> -> vector<64x256xf32>
    %60 = vector.extract_strided_slice %59 {offsets = [0, 0], sizes = [64, 128], strides = [1, 1]} : vector<64x256xf32> to vector<64x128xf32>
    %61 = vector.broadcast %6 : f32 to vector<64x128xf32>
    %62 = arith.mulf %61, %60 : vector<64x128xf32>
    %63 = arith.addf %57, %62 : vector<64x128xf32>
    %64 = vector.extract_strided_slice %59 {offsets = [0, 128], sizes = [64, 128], strides = [1, 1]} : vector<64x256xf32> to vector<64x128xf32>
    %65 = vector.broadcast %7 : f32 to vector<64x128xf32>
    %66 = arith.mulf %65, %64 : vector<64x128xf32>
    %67 = arith.addf %63, %66 : vector<64x128xf32>
    %68 = arith.truncf %59 : vector<64x256xf32> to vector<64x256xbf16>
    %cst_21 = arith.constant dense<0.000000e+00> : vector<64x256xf32>
    %69 = tpu.matmul %36, %68, %cst_21 {dimension_numbers = #tpu.dot_dimension_numbers<[1], [0], [0], [1], [0, 0, 1, 1], [], []>} : vector<64x64xbf16>, vector<64x256xbf16>, vector<64x256xf32> -> vector<64x256xf32>
    %70 = vector.extract_strided_slice %69 {offsets = [0, 0], sizes = [64, 128], strides = [1, 1]} : vector<64x256xf32> to vector<64x128xf32>
    %71 = vector.broadcast %8 : f32 to vector<64x128xf32>
    %72 = arith.mulf %71, %70 : vector<64x128xf32>
    %73 = arith.addf %67, %72 : vector<64x128xf32>
    %74 = vector.extract_strided_slice %69 {offsets = [0, 128], sizes = [64, 128], strides = [1, 1]} : vector<64x256xf32> to vector<64x128xf32>
    %75 = vector.broadcast %9 : f32 to vector<64x128xf32>
    %76 = arith.mulf %75, %74 : vector<64x128xf32>
    %77 = arith.addf %73, %76 : vector<64x128xf32>
    %78 = arith.truncf %69 : vector<64x256xf32> to vector<64x256xbf16>
    %cst_22 = arith.constant dense<0.000000e+00> : vector<64x256xf32>
    %79 = tpu.matmul %36, %78, %cst_22 {dimension_numbers = #tpu.dot_dimension_numbers<[1], [0], [0], [1], [0, 0, 1, 1], [], []>} : vector<64x64xbf16>, vector<64x256xbf16>, vector<64x256xf32> -> vector<64x256xf32>
    %80 = vector.extract_strided_slice %79 {offsets = [0, 0], sizes = [64, 128], strides = [1, 1]} : vector<64x256xf32> to vector<64x128xf32>
    %81 = vector.broadcast %10 : f32 to vector<64x128xf32>
    %82 = arith.mulf %81, %80 : vector<64x128xf32>
    %83 = arith.addf %77, %82 : vector<64x128xf32>
    %c0_23 = arith.constant 0 : index
    %c0_24 = arith.constant 0 : index
    %c0_25 = arith.constant 0 : index
    %84 = vector.load %arg8[%c0_23, %c0_24, %c0_25] : memref<1x64x128xf32, #tpu.memory_space<vmem>>, vector<1x64x128xf32>
    %85 = vector.shape_cast %84 : vector<1x64x128xf32> to vector<64x128xf32>
    %86 = vector.shape_cast %83 : vector<64x128xf32> to vector<1x64x128xf32>
    tpu.vector_store %arg8[%c0_23, %c0_24, %c0_25], %86 {strides = array<i32>} : memref<1x64x128xf32, #tpu.memory_space<vmem>>, vector<1x64x128xf32>,
    return
  }
  func.func @transform_0(%arg0: i32) -> i32 {
    %c0_i32 = arith.constant 0 : i32
    %c0_i32_0 = arith.constant 0 : i32
    return %c0_i32 : i32
  }
  func.func @transform_1(%arg0: i32) -> (i32, i32, i32) {
    %c0_i32 = arith.constant 0 : i32
    %c0_i32_0 = arith.constant 0 : i32
    %c0_i32_1 = arith.constant 0 : i32
    return %arg0, %c0_i32, %c0_i32_0 : i32, i32, i32
  }
  func.func @transform_2(%arg0: i32) -> (i32, i32) {
    %c0_i32 = arith.constant 0 : i32
    %c0_i32_0 = arith.constant 0 : i32
    %c0_i32_1 = arith.constant 0 : i32
    return %c0_i32, %c0_i32_0 : i32, i32
  }
  func.func @transform_3(%arg0: i32) -> (i32, i32) {
    %c0_i32 = arith.constant 0 : i32
    %c0_i32_0 = arith.constant 0 : i32
    %c0_i32_1 = arith.constant 0 : i32
    return %c0_i32, %c0_i32_0 : i32, i32
  }
  func.func @transform_4(%arg0: i32) -> (i32, i32) {
    %c0_i32 = arith.constant 0 : i32
    %c0_i32_0 = arith.constant 0 : i32
    %c0_i32_1 = arith.constant 0 : i32
    return %c0_i32, %c0_i32_0 : i32, i32
  }
  func.func @transform_5(%arg0: i32) -> (i32, i32) {
    %c0_i32 = arith.constant 0 : i32
    %c0_i32_0 = arith.constant 0 : i32
    %c0_i32_1 = arith.constant 0 : i32
    return %c0_i32, %c0_i32_0 : i32, i32
  }
  func.func @transform_6(%arg0: i32) -> (i32, i32, i32) {
    %c0_i32 = arith.constant 0 : i32
    %c0_i32_0 = arith.constant 0 : i32
    %c0_i32_1 = arith.constant 0 : i32
    return %arg0, %c0_i32, %c0_i32_0 : i32, i32, i32
  }
  func.func @transform_7(%arg0: i32) -> (i32, i32, i32) {
    %c0_i32 = arith.constant 0 : i32
    %c0_i32_0 = arith.constant 0 : i32
    %c0_i32_1 = arith.constant 0 : i32
    return %arg0, %c0_i32, %c0_i32_0 : i32, i32, i32
  }
}

</mosaic_0001>

<llo_original>
// kernel: tpu_custom_call.1
$region0: #{tpu_custom_call.1}
  #allocation0 [shape = 'u32[]', space=smem, size = 0x4, offset = 0x4, fixed_abs, tag = 'smem constant byte address 0x4 - core index']
  #allocation1 [shape = 'u32[72,128]{1,0:T(1,128)}', space=vmem, size = 0x9000, scoped, tag = 'internal scratch']
  %s0 = inlined_call_operand.vmem [shape: f32[11], index: 0, kind: input, shape index: {}]
  %s1 = inlined_call_operand.vmem [shape: bf16[4,64,16], index: 1, kind: input, shape index: {}]
  %s2 = inlined_call_operand.vmem [shape: bf16[16,32], index: 2, kind: input, shape index: {}]
  %s3 = inlined_call_operand.vmem [shape: f32[1,32], index: 3, kind: input, shape index: {}]
  %s4 = inlined_call_operand.vmem [shape: bf16[32,128], index: 4, kind: input, shape index: {}]
  %s5 = inlined_call_operand.vmem [shape: f32[1,128], index: 5, kind: input, shape index: {}]
  %s6 = inlined_call_operand.vmem [shape: bf16[4,64,64], index: 6, kind: input, shape index: {}]
  %s7 = inlined_call_operand.hbm [shape: f32[4,64,128], index: 7, kind: output, shape index: {}]
  %s8 = sld [smem:[#allocation0]]
  $region65: #{tpu_custom_call.1} parent=0
    _
  %s10 = ssub.s32 1, %s8
  %s11 = scalar_select 0, %s10, %s8
  $region1: #{tpu_custom_call.1} parent=0
    #allocation2 [shape = 'u8[512]{0}', space=smem, size = 0x200, scoped, tag = 'input window, operand 0, single buffered']
    #allocation3 [shape = 's32[2]{0}', space=sflag, size = 0x8, scoped, tag = 'scoped memory for tpu_custom_call.1']
    #allocation4 [shape = 's32[2]{0}', space=sflag, size = 0x8, scoped, tag = 'scoped memory for tpu_custom_call.1']
    #allocation5 [shape = 'u8[65536]{0}', space=vmem, size = 0x10000, scoped, tag = 'output window, operand 0']
    %12 = vsyncpa [#allocation4], 0
    %13 = vsyncpa [#allocation3], 0
    %s14 = scalar_lea.sflag [#allocation3], 1
    %15 = vsyncpa %s14, 0
    loop: start=0, step=1, limit=6
    $region2: #{tpu_custom_call.1} parent=1 // loop_pre_header
      _
    $region3: #{tpu_custom_call.1} parent=1 // loop_header
      %s17 = sphi 0, %s21
      %p18 = scmp.ge.s32.totalorder %s17, 6
      %s25 = sphi 0, %s25
      %s27 = sphi 0, %s25
      %s28 = sphi 0, %s27
      %s42 = sphi 0, %s28
      %s48 = sphi 0, %s50
      %s51 = sphi 0, %s48
      %s52 = sphi 0, %s51
      %s68 = sphi 0, %s52
      %s72 = sphi 0, %s72
      %s74 = sphi 0, %s72
      %s75 = sphi 0, %s74
      %s89 = sphi 0, %s75
      %s93 = sphi 0, %s93
      %s95 = sphi 0, %s93
      %s96 = sphi 0, %s95
      %s110 = sphi 0, %s96
      %s114 = sphi 0, %s114
      %s116 = sphi 0, %s114
      %s117 = sphi 0, %s116
      %s131 = sphi 0, %s117
      %s135 = sphi 0, %s135
      %s137 = sphi 0, %s135
      %s138 = sphi 0, %s137
      %s152 = sphi 0, %s138
      %s158 = sphi 0, %s160
      %s161 = sphi 0, %s158
      %s162 = sphi 0, %s161
      %s178 = sphi 0, %s162
      %s184 = sphi 0, %s186
      %s187 = sphi 0, %s184
      %s188 = sphi 0, %s187
      %s204 = sphi 0, %s188
    $region4: #{tpu_custom_call.1} parent=1 // loop_header_branch
      %20 = sbr.rel (%p18) target = $region8
    $region5: #{tpu_custom_call.1} parent=1 // loop_body
      %s22 = ssub.s32 %s17, 1
      %s23 = ssub.s32 %s17, 2
      %s24 = sadd.s32 %s17, 1
      %s26 = sadd.s32 %s25, 1
      %p29 = scmp.eq.s32.totalorder %s17, 3
      %p30 = scmp.ne.s32.totalorder %s25, %s27
      %p31 = scmp.eq.s32.totalorder %s17, 0
      %p32 = por %p30, %p31
      %p33 = scmp.ne.s32.totalorder %s25, %s27
      %p34 = scmp.eq.s32.totalorder %s22, 3
      %p35 = por %p33, %p34
      %p36 = scmp.ne.s32.totalorder %s27, %s28
      %p37 = scmp.eq.s32.totalorder %s22, 0
      %p38 = por %p36, %p37
      %p39 = scmp.ne.s32.totalorder %s27, %s28
      %p40 = scmp.eq.s32.totalorder %s23, 3
      %p41 = por %p39, %p40
      %p43 = scmp.ne.s32.totalorder %s28, %s42
      %p44 = scmp.eq.s32.totalorder %s23, 0
      %p45 = por %p43, %p44
      %s46 = ssub.s32 %s17, %s24
      %p47 = scmp.eq.s32.totalorder %s46, 0
      %s49 = sadd.s32 %s48, 1
      %s50 = scalar_select %p47, %s48, %s49
      %p53 = pneg %p47
      %p54 = scmp.eq.s32.totalorder %s17, 3
      %p55 = por %p53, %p54
      %p56 = scmp.ne.s32.totalorder %s48, %s51
      %p57 = scmp.eq.s32.totalorder %s17, 0
      %p58 = por %p56, %p57
      %p59 = scmp.ne.s32.totalorder %s48, %s51
      %p60 = scmp.eq.s32.totalorder %s22, 3
      %p61 = por %p59, %p60
      %p62 = scmp.ne.s32.totalorder %s51, %s52
      %p63 = scmp.eq.s32.totalorder %s22, 0
      %p64 = por %p62, %p63
      %p65 = scmp.ne.s32.totalorder %s51, %s52
      %p66 = scmp.eq.s32.totalorder %s23, 3
      %p67 = por %p65, %p66
      %p69 = scmp.ne.s32.totalorder %s52, %s68
      %p70 = scmp.eq.s32.totalorder %s23, 0
      %p71 = por %p69, %p70
      %s73 = sadd.s32 %s72, 1
      %p76 = scmp.eq.s32.totalorder %s17, 3
      %p77 = scmp.ne.s32.totalorder %s72, %s74
      %p78 = scmp.eq.s32.totalorder %s17, 0
      %p79 = por %p77, %p78
      %p80 = scmp.ne.s32.totalorder %s72, %s74
      %p81 = scmp.eq.s32.totalorder %s22, 3
      %p82 = por %p80, %p81
      %p83 = scmp.ne.s32.totalorder %s74, %s75
      %p84 = scmp.eq.s32.totalorder %s22, 0
      %p85 = por %p83, %p84
      %p86 = scmp.ne.s32.totalorder %s74, %s75
      %p87 = scmp.eq.s32.totalorder %s23, 3
      %p88 = por %p86, %p87
      %p90 = scmp.ne.s32.totalorder %s75, %s89
      %p91 = scmp.eq.s32.totalorder %s23, 0
      %p92 = por %p90, %p91
      %s94 = sadd.s32 %s93, 1
      %p97 = scmp.eq.s32.totalorder %s17, 3
      %p98 = scmp.ne.s32.totalorder %s93, %s95
      %p99 = scmp.eq.s32.totalorder %s17, 0
      %p100 = por %p98, %p99
      %p101 = scmp.ne.s32.totalorder %s93, %s95
      %p102 = scmp.eq.s32.totalorder %s22, 3
      %p103 = por %p101, %p102
      %p104 = scmp.ne.s32.totalorder %s95, %s96
      %p105 = scmp.eq.s32.totalorder %s22, 0
      %p106 = por %p104, %p105
      %p107 = scmp.ne.s32.totalorder %s95, %s96
      %p108 = scmp.eq.s32.totalorder %s23, 3
      %p109 = por %p107, %p108
      %p111 = scmp.ne.s32.totalorder %s96, %s110
      %p112 = scmp.eq.s32.totalorder %s23, 0
      %p113 = por %p111, %p112
      %s115 = sadd.s32 %s114, 1
      %p118 = scmp.eq.s32.totalorder %s17, 3
      %p119 = scmp.ne.s32.totalorder %s114, %s116
      %p120 = scmp.eq.s32.totalorder %s17, 0
      %p121 = por %p119, %p120
      %p122 = scmp.ne.s32.totalorder %s114, %s116
      %p123 = scmp.eq.s32.totalorder %s22, 3
      %p124 = por %p122, %p123
      %p125 = scmp.ne.s32.totalorder %s116, %s117
      %p126 = scmp.eq.s32.totalorder %s22, 0
      %p127 = por %p125, %p126
      %p128 = scmp.ne.s32.totalorder %s116, %s117
      %p129 = scmp.eq.s32.totalorder %s23, 3
      %p130 = por %p128, %p129
      %p132 = scmp.ne.s32.totalorder %s117, %s131
      %p133 = scmp.eq.s32.totalorder %s23, 0
      %p134 = por %p132, %p133
      %s136 = sadd.s32 %s135, 1
      %p139 = scmp.eq.s32.totalorder %s17, 3
      %p140 = scmp.ne.s32.totalorder %s135, %s137
      %p141 = scmp.eq.s32.totalorder %s17, 0
      %p142 = por %p140, %p141
      %p143 = scmp.ne.s32.totalorder %s135, %s137
      %p144 = scmp.eq.s32.totalorder %s22, 3
      %p145 = por %p143, %p144
      %p146 = scmp.ne.s32.totalorder %s137, %s138
      %p147 = scmp.eq.s32.totalorder %s22, 0
      %p148 = por %p146, %p147
      %p149 = scmp.ne.s32.totalorder %s137, %s138
      %p150 = scmp.eq.s32.totalorder %s23, 3
      %p151 = por %p149, %p150
      %p153 = scmp.ne.s32.totalorder %s138, %s152
      %p154 = scmp.eq.s32.totalorder %s23, 0
      %p155 = por %p153, %p154
      %s156 = ssub.s32 %s17, %s24
      %p157 = scmp.eq.s32.totalorder %s156, 0
      %s159 = sadd.s32 %s158, 1
      %s160 = scalar_select %p157, %s158, %s159
      %p163 = pneg %p157
      %p164 = scmp.eq.s32.totalorder %s17, 3
      %p165 = por %p163, %p164
      %p166 = scmp.ne.s32.totalorder %s158, %s161
      %p167 = scmp.eq.s32.totalorder %s17, 0
      %p168 = por %p166, %p167
      %p169 = scmp.ne.s32.totalorder %s158, %s161
      %p170 = scmp.eq.s32.totalorder %s22, 3
      %p171 = por %p169, %p170
      %p172 = scmp.ne.s32.totalorder %s161, %s162
      %p173 = scmp.eq.s32.totalorder %s22, 0
      %p174 = por %p172, %p173
      %p175 = scmp.ne.s32.totalorder %s161, %s162
      %p176 = scmp.eq.s32.totalorder %s23, 3
      %p177 = por %p175, %p176
      %p179 = scmp.ne.s32.totalorder %s162, %s178
      %p180 = scmp.eq.s32.totalorder %s23, 0
      %p181 = por %p179, %p180
      %s182 = ssub.s32 %s17, %s24
      %p183 = scmp.eq.s32.totalorder %s182, 0
      %s185 = sadd.s32 %s184, 1
      %s186 = scalar_select %p183, %s184, %s185
      %p189 = pneg %p183
      %p190 = scmp.eq.s32.totalorder %s17, 3
      %p191 = por %p189, %p190
      %p192 = scmp.ne.s32.totalorder %s184, %s187
      %p193 = scmp.eq.s32.totalorder %s17, 0
      %p194 = por %p192, %p193
      %p195 = scmp.ne.s32.totalorder %s184, %s187
      %p196 = scmp.eq.s32.totalorder %s22, 3
      %p197 = por %p195, %p196
      %p198 = scmp.ne.s32.totalorder %s187, %s188
      %p199 = scmp.eq.s32.totalorder %s22, 0
      %p200 = por %p198, %p199
      %p201 = scmp.ne.s32.totalorder %s187, %s188
      %p202 = scmp.eq.s32.totalorder %s23, 3
      %p203 = por %p201, %p202
      %p205 = scmp.ne.s32.totalorder %s188, %s204
      %p206 = scmp.eq.s32.totalorder %s23, 0
      %p207 = por %p205, %p206
      %p208 = scmp.le.s32.totalorder 1, %s17
      %p209 = scmp.lt.s32.totalorder %s17, 5
      %p210 = pnand %p208, %p209
      %p211 = pneg %p210
      // Predicated region
      $region9: #{tpu_custom_call.1} parent=5 // pred_check
        _
      $region10: #{tpu_custom_call.1} parent=5 // pred_check_branch
        %213 = sbr.rel (%p210) target = $region12
      $region11: #{tpu_custom_call.1} parent=5 // pred_region
        %s214 = ssub.s32 %s17, 1
        // Predicated region
        $region13: #{tpu_custom_call.1} parent=11 // pred_check
          %p215 = pneg %p38
        $region14: #{tpu_custom_call.1} parent=11 // pred_check_branch
          %217 = sbr.rel (%p215) target = $region16
        $region15: #{tpu_custom_call.1} parent=11 // pred_region
          %219 = vsyncadd [#allocation4], 0
          %s221 = sshll.u32 %s0, 4
          %s222 = int_to_ptr.vmem [resolvable:$true] %s221
          %224 = dma.vmem_to_smem %s222, 16, [#allocation2], [#allocation4]
        $region16: #{tpu_custom_call.1} parent=11 // pred_fallthru
          _
        // Predicated region
        $region17: #{tpu_custom_call.1} parent=11 // pred_check
          %p225 = pneg %p85
        $region18: #{tpu_custom_call.1} parent=11 // pred_check_branch
          %227 = sbr.rel (%p225) target = $region20
        $region19: #{tpu_custom_call.1} parent=11 // pred_region
          _
        $region20: #{tpu_custom_call.1} parent=11 // pred_fallthru
          _
        // Predicated region
        $region21: #{tpu_custom_call.1} parent=11 // pred_check
          %p228 = pneg %p106
        $region22: #{tpu_custom_call.1} parent=11 // pred_check_branch
          %230 = sbr.rel (%p228) target = $region24
        $region23: #{tpu_custom_call.1} parent=11 // pred_region
          _
        $region24: #{tpu_custom_call.1} parent=11 // pred_fallthru
          _
        // Predicated region
        $region25: #{tpu_custom_call.1} parent=11 // pred_check
          %p231 = pneg %p127
        $region26: #{tpu_custom_call.1} parent=11 // pred_check_branch
          %233 = sbr.rel (%p231) target = $region28
        $region27: #{tpu_custom_call.1} parent=11 // pred_region
          _
        $region28: #{tpu_custom_call.1} parent=11 // pred_fallthru
          _
        // Predicated region
        $region29: #{tpu_custom_call.1} parent=11 // pred_check
          %p234 = pneg %p148
        $region30: #{tpu_custom_call.1} parent=11 // pred_check_branch
          %236 = sbr.rel (%p234) target = $region32
        $region31: #{tpu_custom_call.1} parent=11 // pred_region
          _
        $region32: #{tpu_custom_call.1} parent=11 // pred_fallthru
          _
      $region12: #{tpu_custom_call.1} parent=5 // pred_fallthru
        _
      %p237 = scmp.lt.s32.totalorder %s17, 4
      // Predicated region
      $region33: #{tpu_custom_call.1} parent=5 // pred_check
        %p238 = pneg %p237
      $region34: #{tpu_custom_call.1} parent=5 // pred_check_branch
        %240 = sbr.rel (%p238) target = $region36
      $region35: #{tpu_custom_call.1} parent=5 // pred_region
        // Predicated region
        $region37: #{tpu_custom_call.1} parent=35 // pred_check
          %p241 = pneg %p58
        $region38: #{tpu_custom_call.1} parent=35 // pred_check_branch
          %243 = sbr.rel (%p241) target = $region40
        $region39: #{tpu_custom_call.1} parent=35 // pred_region
          %p244 = scmp.lt.s32.totalorder %s17, 3
          %s245 = scalar_select %p244, %s17, 3
          %s246 = smul.addr %s245, 8
          %s247 = smul.addr %s246, 4
          %s248 = scalar_lea.vmem %s1, %s247
        $region40: #{tpu_custom_call.1} parent=35 // pred_fallthru
          _
        // Predicated region
        $region41: #{tpu_custom_call.1} parent=35 // pred_check
          %p249 = pneg %p168
        $region42: #{tpu_custom_call.1} parent=35 // pred_check_branch
          %251 = sbr.rel (%p249) target = $region44
        $region43: #{tpu_custom_call.1} parent=35 // pred_region
          %p252 = scmp.lt.s32.totalorder %s17, 3
          %s253 = scalar_select %p252, %s17, 3
          %s254 = smul.addr %s253, 8
          %s255 = smul.addr %s254, 4
          %s256 = scalar_lea.vmem %s6, %s255
        $region44: #{tpu_custom_call.1} parent=35 // pred_fallthru
          _
      $region36: #{tpu_custom_call.1} parent=5 // pred_fallthru
        _
      %p257 = scmp.le.s32.totalorder 1, %s17
      %p258 = scmp.lt.s32.totalorder %s17, 5
      %p259 = pnand %p257, %p258
      %p260 = pneg %p259
      // Predicated region
      $region45: #{tpu_custom_call.1} parent=5 // pred_check
        _
      $region46: #{tpu_custom_call.1} parent=5 // pred_check_branch
        %262 = sbr.rel (%p259) target = $region48
      $region47: #{tpu_custom_call.1} parent=5 // pred_region
        %s263 = ssub.s32 %s17, 1
        // Predicated region
        $region49: #{tpu_custom_call.1} parent=47 // pred_check
          %p264 = pneg %p38
        $region50: #{tpu_custom_call.1} parent=47 // pred_check_branch
          %266 = sbr.rel (%p264) target = $region52
        $region51: #{tpu_custom_call.1} parent=47 // pred_region
          %268 = dma.done [#allocation4], 16
        $region52: #{tpu_custom_call.1} parent=47 // pred_fallthru
          _
        %269 = sfence
        %p270 = pneg %p38
        %p271 = pneg %p35
        %p272 = scmp.lt.s32.totalorder %s22, 3
        %s273 = scalar_select %p272, %s22, 3
        %s274 = smul.addr %s273, 8
        %s275 = smul.addr %s274, 4
        %s276 = scalar_lea.vmem %s1, %s275
        %p277 = pneg %p64
        %p278 = pneg %p61
        %p279 = pneg %p85
        %p280 = pneg %p82
        %p281 = pneg %p106
        %p282 = pneg %p103
        %p283 = pneg %p127
        %p284 = pneg %p124
        %p285 = pneg %p148
        %p286 = pneg %p145
        %p287 = scmp.lt.s32.totalorder %s22, 3
        %s288 = scalar_select %p287, %s22, 3
        %s289 = smul.addr %s288, 8
        %s290 = smul.addr %s289, 4
        %s291 = scalar_lea.vmem %s6, %s290
        %p292 = pneg %p174
        %p293 = pneg %p171
        %p294 = pneg %p200
        %p295 = pneg %p197
        %s296 = sand.u32 %s187, 1
        %s297 = scalar_lea.sflag [#allocation3], %s296
        %s298 = sand.u32 %s187, 1
        %s299 = smul.addr %s298, 64
        %s300 = scalar_lea.vmem [#allocation5], %s299
        %p301 = scmp.lt.s32.totalorder %s22, 3
        %s302 = scalar_select %p301, %s22, 3
        %s303 = smul.addr %s302, 8
        %s304 = smul.addr %s303, 4
        %s305 = scalar_lea.vmem %s1, %s304
        %p306 = scmp.lt.s32.totalorder %s22, 3
        %s307 = scalar_select %p306, %s22, 3
        %s308 = smul.addr %s307, 8
        %s309 = smul.addr %s308, 4
        %s310 = scalar_lea.vmem %s6, %s309
        %s312 = sld [smem:[#allocation2]]
        %s313 = sld [smem:[#allocation2 + $0x1]]
        %s314 = sld [smem:[#allocation2 + $0x2]]
        %s315 = sld [smem:[#allocation2 + $0x3]]
        %s316 = sld [smem:[#allocation2 + $0x4]]
        %s317 = sld [smem:[#allocation2 + $0x5]]
        %s318 = sld [smem:[#allocation2 + $0x6]]
        %s319 = sld [smem:[#allocation2 + $0x7]]
        %s320 = sld [smem:[#allocation2 + $0x8]]
        %s321 = sld [smem:[#allocation2 + $0x9]]
        %s322 = sld [smem:[#allocation2 + $0xa]]
        %v323 = vld [vmem:[%s310] sm:$0xf]
        %v324 = vld [vmem:[%s310 + $0x4] sm:$0xf]
        %v325 = vld [vmem:[%s310 + $0x8] sm:$0xf]
        %v326 = vld [vmem:[%s310 + $0xc] sm:$0xf]
        %v327 = vld [vmem:[%s310 + $0x10] sm:$0xf]
        %v328 = vld [vmem:[%s310 + $0x14] sm:$0xf]
        %v329 = vld [vmem:[%s310 + $0x18] sm:$0xf]
        %v330 = vld [vmem:[%s310 + $0x1c] sm:$0xf]
        %v331 = vld [vmem:[%s305] sm:$0xf]
        %v332 = vld [vmem:[%s305 + $0x4] sm:$0xf]
        %v333 = vld [vmem:[%s305 + $0x8] sm:$0xf]
        %v334 = vld [vmem:[%s305 + $0xc] sm:$0xf]
        %v335 = vld [vmem:[%s305 + $0x10] sm:$0xf]
        %v336 = vld [vmem:[%s305 + $0x14] sm:$0xf]
        %v337 = vld [vmem:[%s305 + $0x18] sm:$0xf]
        %v338 = vld [vmem:[%s305 + $0x1c] sm:$0xf]
        %v339 = vld [vmem:[%s2] sm:$0xf]
        %v340 = vld [vmem:[%s2 + $0x4] sm:$0xf]
        %v341 = vld [vmem:[%s3] sm:$0x1]
        %v343 = vperm.slane %v341, 0
        %v353 = vunpack.c.l.b16 %v331
        %v354 = vunpack.c.l.b16 %v332
        %v355 = vunpack.c.l.b16 %v333
        %v356 = vunpack.c.l.b16 %v334
        %v357 = vunpack.c.l.b16 %v335
        %v358 = vunpack.c.l.b16 %v336
        %v359 = vunpack.c.l.b16 %v337
        %v360 = vunpack.c.l.b16 %v338
        %v361 = vpack.c.b16 %v354, %v353
        %v362 = vpack.c.b16 %v356, %v355
        %v363 = vpack.c.b16 %v358, %v357
        %v364 = vpack.c.b16 %v360, %v359
        %v367 = vunpack.c.l.b16 %v339
        %v368 = vunpack.c.l.b16 %v340
        %v369 = vpack.c.b16 %v368, %v367
        %vm371 = vcmask 130048
        %v373 = vsel %vm371, %v361, 0
        %v376 = vsel %vm371, %v362, 0
        %v379 = vsel %vm371, %v363, 0
        %v382 = vsel %vm371, %v364, 0
        %384 = vmatpush.bf16.msra.mxu0 0
        %385 = vmatpush.bf16.msra.mxu0 0
        %386 = vmatpush.bf16.msra.mxu0 0
        %387 = vmatpush.bf16.msra.mxu0 0
        %388 = vmatpush.bf16.msra.mxu0 0
        %389 = vmatpush.bf16.msra.mxu0 0
        %390 = vmatpush.bf16.msra.mxu0 0
        %391 = vmatpush.bf16.msra.mxu0 %v369
        %392 = vmatmul.bf16.gmra.mxu0 %v373
        %v393 = vpop.f32.mrf.mxu0
        %v394 = vadd.f32 %v343, %v393
        %v395 = vpop.f32.mrf.mxu0
        %v396 = vadd.f32 %v343, %v395
        %397 = vmatmul.bf16.gmra.mxu0 %v376
        %v398 = vpop.f32.mrf.mxu0
        %v399 = vadd.f32 %v343, %v398
        %v400 = vpop.f32.mrf.mxu0
        %v401 = vadd.f32 %v343, %v400
        %402 = vmatmul.bf16.gmra.mxu0 %v379
        %v403 = vpop.f32.mrf.mxu0
        %v404 = vadd.f32 %v343, %v403
        %v405 = vpop.f32.mrf.mxu0
        %v406 = vadd.f32 %v343, %v405
        %407 = vmatmul.bf16.gmra.mxu0 %v382
        %v408 = vpop.f32.mrf.mxu0
        %v409 = vadd.f32 %v343, %v408
        %v410 = vpop.f32.mrf.mxu0
        %v411 = vadd.f32 %v343, %v410
        %412 = vdwg.mxu0
        %v413 = vmax.f32 %v394, 0.0
        %v414 = vmax.f32 %v396, 0.0
        %v415 = vmax.f32 %v399, 0.0
        %v416 = vmax.f32 %v401, 0.0
        %v417 = vmax.f32 %v404, 0.0
        %v418 = vmax.f32 %v406, 0.0
        %v419 = vmax.f32 %v409, 0.0
        %v420 = vmax.f32 %v411, 0.0
        %v421 = vpack.c.bf16 %v414, %v413
        %v422 = vpack.c.bf16 %v416, %v415
        %v423 = vpack.c.bf16 %v418, %v417
        %v424 = vpack.c.bf16 %v420, %v419
        %v425 = vld [vmem:[%s4] sm:$0xf]
        %v426 = vld [vmem:[%s4 + $0x4] sm:$0xf]
        %v427 = vld [vmem:[%s4 + $0x8] sm:$0xf]
        %v428 = vld [vmem:[%s4 + $0xc] sm:$0xf]
        %v429 = vld [vmem:[%s5] sm:$0x1]
        %v431 = vperm.slane %v429, 0
        %v437 = vunpack.c.l.b16 %v425
        %v438 = vunpack.c.l.b16 %v426
        %v439 = vunpack.c.l.b16 %v427
        %v440 = vunpack.c.l.b16 %v428
        %v441 = vpack.c.b16 %v438, %v437
        %v442 = vpack.c.b16 %v440, %v439
        %vm445 = vcmask 261120
        %v447 = vsel %vm445, %v421, 0
        %v450 = vsel %vm445, %v422, 0
        %v453 = vsel %vm445, %v423, 0
        %v456 = vsel %vm445, %v424, 0
        %458 = vmatpush.bf16.msra.mxu0 0
        %459 = vmatpush.bf16.msra.mxu0 0
        %460 = vmatpush.bf16.msra.mxu0 0
        %461 = vmatpush.bf16.msra.mxu0 0
        %462 = vmatpush.bf16.msra.mxu0 0
        %463 = vmatpush.bf16.msra.mxu0 0
        %464 = vmatpush.bf16.msra.mxu0 %v442
        %465 = vmatpush.bf16.msra.mxu0 %v441
        %466 = vmatmul.bf16.gmra.mxu0 %v447
        %v467 = vpop.f32.mrf.mxu0
        %v468 = vadd.f32 %v431, %v467
        %v469 = vpop.f32.mrf.mxu0
        %v470 = vadd.f32 %v431, %v469
        %471 = vmatmul.bf16.gmra.mxu0 %v450
        %v472 = vpop.f32.mrf.mxu0
        %v473 = vadd.f32 %v431, %v472
        %v474 = vpop.f32.mrf.mxu0
        %v475 = vadd.f32 %v431, %v474
        %476 = vmatmul.bf16.gmra.mxu0 %v453
        %v477 = vpop.f32.mrf.mxu0
        %v478 = vadd.f32 %v431, %v477
        %v479 = vpop.f32.mrf.mxu0
        %v480 = vadd.f32 %v431, %v479
        %481 = vmatmul.bf16.gmra.mxu0 %v456
        %v482 = vpop.f32.mrf.mxu0
        %v483 = vadd.f32 %v431, %v482
        %v484 = vpop.f32.mrf.mxu0
        %v485 = vadd.f32 %v431, %v484
        %486 = vdwg.mxu0
        %v487 = vstv %s312
        %v488 = vmul.f32 %v487, %v468
        %v489 = vmul.f32 %v487, %v470
        %v490 = vmul.f32 %v487, %v473
        %v491 = vmul.f32 %v487, %v475
        %v492 = vmul.f32 %v487, %v478
        %v493 = vmul.f32 %v487, %v480
        %v494 = vmul.f32 %v487, %v483
        %v495 = vmul.f32 %v487, %v485
        %v496 = vpack.c.bf16 %v470, %v468
        %v497 = vpack.c.bf16 %v475, %v473
        %v498 = vpack.c.bf16 %v480, %v478
        %v499 = vpack.c.bf16 %v485, %v483
        %v508 = vunpack.c.l.b16 %v323
        %v509 = vunpack.c.l.b16 %v324
        %v510 = vunpack.c.l.b16 %v325
        %v511 = vunpack.c.l.b16 %v326
        %v512 = vunpack.c.l.b16 %v327
        %v513 = vunpack.c.l.b16 %v328
        %v514 = vunpack.c.l.b16 %v329
        %v515 = vunpack.c.l.b16 %v330
        %v516 = vpack.c.b16 %v509, %v508
        %v517 = vpack.c.b16 %v511, %v510
        %v518 = vpack.c.b16 %v513, %v512
        %v519 = vpack.c.b16 %v515, %v514
        %vm520 = vcmask 523264
        %v522 = vsel %vm520, %v516, 0
        %v525 = vsel %vm520, %v517, 0
        %v528 = vsel %vm520, %v518, 0
        %v531 = vsel %vm520, %v519, 0
        %533 = vmatpush.bf16.msra.mxu0 0
        %534 = vmatpush.bf16.msra.mxu0 0
        %535 = vmatpush.bf16.msra.mxu0 0
        %536 = vmatpush.bf16.msra.mxu0 0
        %537 = vmatpush.bf16.msra.mxu0 %v499
        %538 = vmatpush.bf16.msra.mxu0 %v498
        %539 = vmatpush.bf16.msra.mxu0 %v497
        %540 = vmatpush.bf16.msra.mxu0 %v496
        %541 = vmatmul.bf16.gmra.mxu0 %v522
        %v542 = vpop.f32.mrf.mxu0
        %v543 = vadd.f32 0.0, %v542
        %v544 = vpop.f32.mrf.mxu0
        %v545 = vadd.f32 0.0, %v544
        %546 = vmatmul.bf16.gmra.mxu0 %v525
        %v547 = vpop.f32.mrf.mxu0
        %v548 = vadd.f32 0.0, %v547
        %v549 = vpop.f32.mrf.mxu0
        %v550 = vadd.f32 0.0, %v549
        %551 = vmatmul.bf16.gmra.mxu0 %v528
        %v552 = vpop.f32.mrf.mxu0
        %v553 = vadd.f32 0.0, %v552
        %v554 = vpop.f32.mrf.mxu0
        %v555 = vadd.f32 0.0, %v554
        %556 = vmatmul.bf16.gmra.mxu0 %v531
        %v557 = vpop.f32.mrf.mxu0
        %v558 = vadd.f32 0.0, %v557
        %v559 = vpop.f32.mrf.mxu0
        %v560 = vadd.f32 0.0, %v559
        %561 = vdwg.mxu0
        %v562 = vstv %s313
        %v563 = vmul.f32 %v562, %v543
        %v564 = vmul.f32 %v562, %v545
        %v565 = vmul.f32 %v562, %v548
        %v566 = vmul.f32 %v562, %v550
        %v567 = vmul.f32 %v562, %v553
        %v568 = vmul.f32 %v562, %v555
        %v569 = vmul.f32 %v562, %v558
        %v570 = vmul.f32 %v562, %v560
        %v571 = vadd.f32 %v488, %v563
        %v572 = vadd.f32 %v489, %v564
        %v573 = vadd.f32 %v490, %v565
        %v574 = vadd.f32 %v491, %v566
        %v575 = vadd.f32 %v492, %v567
        %v576 = vadd.f32 %v493, %v568
        %v577 = vadd.f32 %v494, %v569
        %v578 = vadd.f32 %v495, %v570
        %583 = vmatpush.bf16.msra.mxu0 0
        %584 = vmatpush.bf16.msra.mxu0 0
        %585 = vmatpush.bf16.msra.mxu0 0
        %586 = vmatpush.bf16.msra.mxu0 0
        %587 = vmatpush.bf16.msra.mxu0 %v519
        %588 = vmatpush.bf16.msra.mxu0 %v518
        %589 = vmatpush.bf16.msra.mxu0 %v517
        %590 = vmatpush.bf16.msra.mxu0 %v516
        %591 = vmatmul.bf16.gmra.mxu0 %v522
        %v592 = vpop.f32.mrf.mxu0
        %v593 = vadd.f32 0.0, %v592
        %v594 = vpop.f32.mrf.mxu0
        %v595 = vadd.f32 0.0, %v594
        %596 = vmatmul.bf16.gmra.mxu0 %v525
        %v597 = vpop.f32.mrf.mxu0
        %v598 = vadd.f32 0.0, %v597
        %v599 = vpop.f32.mrf.mxu0
        %v600 = vadd.f32 0.0, %v599
        %601 = vmatmul.bf16.gmra.mxu0 %v528
        %v602 = vpop.f32.mrf.mxu0
        %v603 = vadd.f32 0.0, %v602
        %v604 = vpop.f32.mrf.mxu0
        %v605 = vadd.f32 0.0, %v604
        %606 = vmatmul.bf16.gmra.mxu0 %v531
        %v607 = vpop.f32.mrf.mxu0
        %v608 = vadd.f32 0.0, %v607
        %v609 = vpop.f32.mrf.mxu0
        %v610 = vadd.f32 0.0, %v609
        %611 = vdwg.mxu0
        %v612 = vpack.c.bf16 %v595, %v593
        %v613 = vpack.c.bf16 %v600, %v598
        %v614 = vpack.c.bf16 %v605, %v603
        %v615 = vpack.c.bf16 %v610, %v608
        %v616 = vpack.c.bf16 %v545, %v543
        %v617 = vpack.c.bf16 %v550, %v548
        %v618 = vpack.c.bf16 %v555, %v553
        %v619 = vpack.c.bf16 %v560, %v558
        %v621 = vsel %vm520, %v612, 0
        %v624 = vsel %vm520, %v613, 0
        %v627 = vsel %vm520, %v614, 0
        %v630 = vsel %vm520, %v615, 0
        %632 = vmatpush.bf16.msra.mxu0 0
        %633 = vmatpush.bf16.msra.mxu0 0
        %634 = vmatpush.bf16.msra.mxu0 0
        %635 = vmatpush.bf16.msra.mxu0 0
        %636 = vmatpush.bf16.msra.mxu0 %v499
        %637 = vmatpush.bf16.msra.mxu0 %v498
        %638 = vmatpush.bf16.msra.mxu0 %v497
        %639 = vmatpush.bf16.msra.mxu0 %v496
        %640 = vmatmul.bf16.gmra.mxu0 %v621
        %v641 = vpop.f32.mrf.mxu0
        %v642 = vadd.f32 0.0, %v641
        %v643 = vpop.f32.mrf.mxu0
        %v644 = vadd.f32 0.0, %v643
        %645 = vmatmul.bf16.gmra.mxu0 %v624
        %v646 = vpop.f32.mrf.mxu0
        %v647 = vadd.f32 0.0, %v646
        %v648 = vpop.f32.mrf.mxu0
        %v649 = vadd.f32 0.0, %v648
        %650 = vmatmul.bf16.gmra.mxu0 %v627
        %v651 = vpop.f32.mrf.mxu0
        %v652 = vadd.f32 0.0, %v651
        %v653 = vpop.f32.mrf.mxu0
        %v654 = vadd.f32 0.0, %v653
        %655 = vmatmul.bf16.gmra.mxu0 %v630
        %v656 = vpop.f32.mrf.mxu0
        %v657 = vadd.f32 0.0, %v656
        %v658 = vpop.f32.mrf.mxu0
        %v659 = vadd.f32 0.0, %v658
        %660 = vdwg.mxu0
        %661 = vmatpush.bf16.msra.mxu0 0
        %662 = vmatpush.bf16.msra.mxu0 0
        %663 = vmatpush.bf16.msra.mxu0 0
        %664 = vmatpush.bf16.msra.mxu0 0
        %665 = vmatpush.bf16.msra.mxu0 %v619
        %666 = vmatpush.bf16.msra.mxu0 %v618
        %667 = vmatpush.bf16.msra.mxu0 %v617
        %668 = vmatpush.bf16.msra.mxu0 %v616
        %669 = vmatmul.bf16.gmra.mxu0 %v621
        %v670 = vpop.f32.mrf.mxu0
        %v671 = vadd.f32 0.0, %v670
        %v672 = vpop.f32.mrf.mxu0
        %v673 = vadd.f32 0.0, %v672
        %674 = vmatmul.bf16.gmra.mxu0 %v624
        %v675 = vpop.f32.mrf.mxu0
        %v676 = vadd.f32 0.0, %v675
        %v677 = vpop.f32.mrf.mxu0
        %v678 = vadd.f32 0.0, %v677
        %679 = vmatmul.bf16.gmra.mxu0 %v627
        %v680 = vpop.f32.mrf.mxu0
        %v681 = vadd.f32 0.0, %v680
        %v682 = vpop.f32.mrf.mxu0
        %v683 = vadd.f32 0.0, %v682
        %684 = vmatmul.bf16.gmra.mxu0 %v630
        %v685 = vpop.f32.mrf.mxu0
        %v686 = vadd.f32 0.0, %v685
        %v687 = vpop.f32.mrf.mxu0
        %v688 = vadd.f32 0.0, %v687
        %689 = vdwg.mxu0
        %v690 = vstv %s314
        %v691 = vmul.f32 %v690, %v642
        %v692 = vmul.f32 %v690, %v644
        %v693 = vmul.f32 %v690, %v647
        %v694 = vmul.f32 %v690, %v649
        %v695 = vmul.f32 %v690, %v652
        %v696 = vmul.f32 %v690, %v654
        %v697 = vmul.f32 %v690, %v657
        %v698 = vmul.f32 %v690, %v659
        %v699 = vadd.f32 %v571, %v691
        %v700 = vadd.f32 %v572, %v692
        %v701 = vadd.f32 %v573, %v693
        %v702 = vadd.f32 %v574, %v694
        %v703 = vadd.f32 %v575, %v695
        %v704 = vadd.f32 %v576, %v696
        %v705 = vadd.f32 %v577, %v697
        %v706 = vadd.f32 %v578, %v698
        %v707 = vstv %s315
        %v708 = vmul.f32 %v707, %v671
        %v709 = vmul.f32 %v707, %v673
        %v710 = vmul.f32 %v707, %v676
        %v711 = vmul.f32 %v707, %v678
        %v712 = vmul.f32 %v707, %v681
        %v713 = vmul.f32 %v707, %v683
        %v714 = vmul.f32 %v707, %v686
        %v715 = vmul.f32 %v707, %v688
        %v716 = vadd.f32 %v699, %v708
        %v717 = vadd.f32 %v700, %v709
        %v718 = vadd.f32 %v701, %v710
        %v719 = vadd.f32 %v702, %v711
        %v720 = vadd.f32 %v703, %v712
        %v721 = vadd.f32 %v704, %v713
        %v722 = vadd.f32 %v705, %v714
        %v723 = vadd.f32 %v706, %v715
        %v724 = vpack.c.bf16 %v644, %v642
        %v725 = vpack.c.bf16 %v673, %v671
        %v726 = vpack.c.bf16 %v649, %v647
        %v727 = vpack.c.bf16 %v678, %v676
        %v728 = vpack.c.bf16 %v654, %v652
        %v729 = vpack.c.bf16 %v683, %v681
        %v730 = vpack.c.bf16 %v659, %v657
        %v731 = vpack.c.bf16 %v688, %v686
        %732 = vmatpush.bf16.msra.mxu0 0
        %733 = vmatpush.bf16.msra.mxu0 0
        %734 = vmatpush.bf16.msra.mxu0 0
        %735 = vmatpush.bf16.msra.mxu0 0
        %736 = vmatpush.bf16.msra.mxu0 %v730
        %737 = vmatpush.bf16.msra.mxu0 %v728
        %738 = vmatpush.bf16.msra.mxu0 %v726
        %739 = vmatpush.bf16.msra.mxu0 %v724
        %740 = vmatmul.bf16.gmra.mxu0 %v621
        %v741 = vpop.f32.mrf.mxu0
        %v742 = vadd.f32 0.0, %v741
        %v743 = vpop.f32.mrf.mxu0
        %v744 = vadd.f32 0.0, %v743
        %745 = vmatmul.bf16.gmra.mxu0 %v624
        %v746 = vpop.f32.mrf.mxu0
        %v747 = vadd.f32 0.0, %v746
        %v748 = vpop.f32.mrf.mxu0
        %v749 = vadd.f32 0.0, %v748
        %750 = vmatmul.bf16.gmra.mxu0 %v627
        %v751 = vpop.f32.mrf.mxu0
        %v752 = vadd.f32 0.0, %v751
        %v753 = vpop.f32.mrf.mxu0
        %v754 = vadd.f32 0.0, %v753
        %755 = vmatmul.bf16.gmra.mxu0 %v630
        %v756 = vpop.f32.mrf.mxu0
        %v757 = vadd.f32 0.0, %v756
        %v758 = vpop.f32.mrf.mxu0
        %v759 = vadd.f32 0.0, %v758
        %760 = vdwg.mxu0
        %761 = vmatpush.bf16.msra.mxu0 0
        %762 = vmatpush.bf16.msra.mxu0 0
        %763 = vmatpush.bf16.msra.mxu0 0
        %764 = vmatpush.bf16.msra.mxu0 0
        %765 = vmatpush.bf16.msra.mxu0 %v731
        %766 = vmatpush.bf16.msra.mxu0 %v729
        %767 = vmatpush.bf16.msra.mxu0 %v727
        %768 = vmatpush.bf16.msra.mxu0 %v725
        %769 = vmatmul.bf16.gmra.mxu0 %v621
        %v770 = vpop.f32.mrf.mxu0
        %v771 = vadd.f32 0.0, %v770
        %v772 = vpop.f32.mrf.mxu0
        %v773 = vadd.f32 0.0, %v772
        %774 = vmatmul.bf16.gmra.mxu0 %v624
        %v775 = vpop.f32.mrf.mxu0
        %v776 = vadd.f32 0.0, %v775
        %v777 = vpop.f32.mrf.mxu0
        %v778 = vadd.f32 0.0, %v777
        %779 = vmatmul.bf16.gmra.mxu0 %v627
        %v780 = vpop.f32.mrf.mxu0
        %v781 = vadd.f32 0.0, %v780
        %v782 = vpop.f32.mrf.mxu0
        %v783 = vadd.f32 0.0, %v782
        %784 = vmatmul.bf16.gmra.mxu0 %v630
        %v785 = vpop.f32.mrf.mxu0
        %v786 = vadd.f32 0.0, %v785
        %v787 = vpop.f32.mrf.mxu0
        %v788 = vadd.f32 0.0, %v787
        %789 = vdwg.mxu0
        %v790 = vstv %s316
        %v791 = vmul.f32 %v790, %v742
        %v792 = vmul.f32 %v790, %v744
        %v793 = vmul.f32 %v790, %v747
        %v794 = vmul.f32 %v790, %v749
        %v795 = vmul.f32 %v790, %v752
        %v796 = vmul.f32 %v790, %v754
        %v797 = vmul.f32 %v790, %v757
        %v798 = vmul.f32 %v790, %v759
        %v799 = vadd.f32 %v716, %v791
        %v800 = vadd.f32 %v717, %v792
        %v801 = vadd.f32 %v718, %v793
        %v802 = vadd.f32 %v719, %v794
        %v803 = vadd.f32 %v720, %v795
        %v804 = vadd.f32 %v721, %v796
        %v805 = vadd.f32 %v722, %v797
        %v806 = vadd.f32 %v723, %v798
        %v807 = vstv %s317
        %v808 = vmul.f32 %v807, %v771
        %v809 = vmul.f32 %v807, %v773
        %v810 = vmul.f32 %v807, %v776
        %v811 = vmul.f32 %v807, %v778
        %v812 = vmul.f32 %v807, %v781
        %v813 = vmul.f32 %v807, %v783
        %v814 = vmul.f32 %v807, %v786
        %v815 = vmul.f32 %v807, %v788
        %v816 = vadd.f32 %v799, %v808
        %v817 = vadd.f32 %v800, %v809
        %v818 = vadd.f32 %v801, %v810
        %v819 = vadd.f32 %v802, %v811
        %v820 = vadd.f32 %v803, %v812
        %v821 = vadd.f32 %v804, %v813
        %v822 = vadd.f32 %v805, %v814
        %v823 = vadd.f32 %v806, %v815
        %v824 = vpack.c.bf16 %v744, %v742
        %v825 = vpack.c.bf16 %v773, %v771
        %v826 = vpack.c.bf16 %v749, %v747
        %v827 = vpack.c.bf16 %v778, %v776
        %v828 = vpack.c.bf16 %v754, %v752
        %v829 = vpack.c.bf16 %v783, %v781
        %v830 = vpack.c.bf16 %v759, %v757
        %v831 = vpack.c.bf16 %v788, %v786
        %832 = vmatpush.bf16.msra.mxu0 0
        %833 = vmatpush.bf16.msra.mxu0 0
        %834 = vmatpush.bf16.msra.mxu0 0
        %835 = vmatpush.bf16.msra.mxu0 0
        %836 = vmatpush.bf16.msra.mxu0 %v830
        %837 = vmatpush.bf16.msra.mxu0 %v828
        %838 = vmatpush.bf16.msra.mxu0 %v826
        %839 = vmatpush.bf16.msra.mxu0 %v824
        %840 = vmatmul.bf16.gmra.mxu0 %v621
        %v841 = vpop.f32.mrf.mxu0
        %v842 = vadd.f32 0.0, %v841
        %v843 = vpop.f32.mrf.mxu0
        %v844 = vadd.f32 0.0, %v843
        %845 = vmatmul.bf16.gmra.mxu0 %v624
        %v846 = vpop.f32.mrf.mxu0
        %v847 = vadd.f32 0.0, %v846
        %v848 = vpop.f32.mrf.mxu0
        %v849 = vadd.f32 0.0, %v848
        %850 = vmatmul.bf16.gmra.mxu0 %v627
        %v851 = vpop.f32.mrf.mxu0
        %v852 = vadd.f32 0.0, %v851
        %v853 = vpop.f32.mrf.mxu0
        %v854 = vadd.f32 0.0, %v853
        %855 = vmatmul.bf16.gmra.mxu0 %v630
        %v856 = vpop.f32.mrf.mxu0
        %v857 = vadd.f32 0.0, %v856
        %v858 = vpop.f32.mrf.mxu0
        %v859 = vadd.f32 0.0, %v858
        %860 = vdwg.mxu0
        %861 = vmatpush.bf16.msra.mxu0 0
        %862 = vmatpush.bf16.msra.mxu0 0
        %863 = vmatpush.bf16.msra.mxu0 0
        %864 = vmatpush.bf16.msra.mxu0 0
        %865 = vmatpush.bf16.msra.mxu0 %v831
        %866 = vmatpush.bf16.msra.mxu0 %v829
        %867 = vmatpush.bf16.msra.mxu0 %v827
        %868 = vmatpush.bf16.msra.mxu0 %v825
        %869 = vmatmul.bf16.gmra.mxu0 %v621
        %v870 = vpop.f32.mrf.mxu0
        %v871 = vadd.f32 0.0, %v870
        %v872 = vpop.f32.mrf.mxu0
        %v873 = vadd.f32 0.0, %v872
        %874 = vmatmul.bf16.gmra.mxu0 %v624
        %v875 = vpop.f32.mrf.mxu0
        %v876 = vadd.f32 0.0, %v875
        %v877 = vpop.f32.mrf.mxu0
        %v878 = vadd.f32 0.0, %v877
        %879 = vmatmul.bf16.gmra.mxu0 %v627
        %v880 = vpop.f32.mrf.mxu0
        %v881 = vadd.f32 0.0, %v880
        %v882 = vpop.f32.mrf.mxu0
        %v883 = vadd.f32 0.0, %v882
        %884 = vmatmul.bf16.gmra.mxu0 %v630
        %v885 = vpop.f32.mrf.mxu0
        %v886 = vadd.f32 0.0, %v885
        %v887 = vpop.f32.mrf.mxu0
        %v888 = vadd.f32 0.0, %v887
        %889 = vdwg.mxu0
        %v890 = vstv %s318
        %v891 = vmul.f32 %v890, %v842
        %v892 = vmul.f32 %v890, %v844
        %v893 = vmul.f32 %v890, %v847
        %v894 = vmul.f32 %v890, %v849
        %v895 = vmul.f32 %v890, %v852
        %v896 = vmul.f32 %v890, %v854
        %v897 = vmul.f32 %v890, %v857
        %v898 = vmul.f32 %v890, %v859
        %v899 = vadd.f32 %v816, %v891
        %v900 = vadd.f32 %v817, %v892
        %v901 = vadd.f32 %v818, %v893
        %v902 = vadd.f32 %v819, %v894
        %v903 = vadd.f32 %v820, %v895
        %v904 = vadd.f32 %v821, %v896
        %v905 = vadd.f32 %v822, %v897
        %v906 = vadd.f32 %v823, %v898
        %v907 = vstv %s319
        %v908 = vmul.f32 %v907, %v871
        %v909 = vmul.f32 %v907, %v873
        %v910 = vmul.f32 %v907, %v876
        %v911 = vmul.f32 %v907, %v878
        %v912 = vmul.f32 %v907, %v881
        %v913 = vmul.f32 %v907, %v883
        %v914 = vmul.f32 %v907, %v886
        %v915 = vmul.f32 %v907, %v888
        %v916 = vadd.f32 %v899, %v908
        %v917 = vadd.f32 %v900, %v909
        %v918 = vadd.f32 %v901, %v910
        %v919 = vadd.f32 %v902, %v911
        %v920 = vadd.f32 %v903, %v912
        %v921 = vadd.f32 %v904, %v913
        %v922 = vadd.f32 %v905, %v914
        %v923 = vadd.f32 %v906, %v915
        %v924 = vpack.c.bf16 %v844, %v842
        %v925 = vpack.c.bf16 %v873, %v871
        %v926 = vpack.c.bf16 %v849, %v847
        %v927 = vpack.c.bf16 %v878, %v876
        %v928 = vpack.c.bf16 %v854, %v852
        %v929 = vpack.c.bf16 %v883, %v881
        %v930 = vpack.c.bf16 %v859, %v857
        %v931 = vpack.c.bf16 %v888, %v886
        %932 = vmatpush.bf16.msra.mxu0 0
        %933 = vmatpush.bf16.msra.mxu0 0
        %934 = vmatpush.bf16.msra.mxu0 0
        %935 = vmatpush.bf16.msra.mxu0 0
        %936 = vmatpush.bf16.msra.mxu0 %v930
        %937 = vmatpush.bf16.msra.mxu0 %v928
        %938 = vmatpush.bf16.msra.mxu0 %v926
        %939 = vmatpush.bf16.msra.mxu0 %v924
        %940 = vmatmul.bf16.gmra.mxu0 %v621
        %v941 = vpop.f32.mrf.mxu0
        %v942 = vadd.f32 0.0, %v941
        %v943 = vpop.f32.mrf.mxu0
        %v944 = vadd.f32 0.0, %v943
        %945 = vmatmul.bf16.gmra.mxu0 %v624
        %v946 = vpop.f32.mrf.mxu0
        %v947 = vadd.f32 0.0, %v946
        %v948 = vpop.f32.mrf.mxu0
        %v949 = vadd.f32 0.0, %v948
        %950 = vmatmul.bf16.gmra.mxu0 %v627
        %v951 = vpop.f32.mrf.mxu0
        %v952 = vadd.f32 0.0, %v951
        %v953 = vpop.f32.mrf.mxu0
        %v954 = vadd.f32 0.0, %v953
        %955 = vmatmul.bf16.gmra.mxu0 %v630
        %v956 = vpop.f32.mrf.mxu0
        %v957 = vadd.f32 0.0, %v956
        %v958 = vpop.f32.mrf.mxu0
        %v959 = vadd.f32 0.0, %v958
        %960 = vdwg.mxu0
        %961 = vmatpush.bf16.msra.mxu0 0
        %962 = vmatpush.bf16.msra.mxu0 0
        %963 = vmatpush.bf16.msra.mxu0 0
        %964 = vmatpush.bf16.msra.mxu0 0
        %965 = vmatpush.bf16.msra.mxu0 %v931
        %966 = vmatpush.bf16.msra.mxu0 %v929
        %967 = vmatpush.bf16.msra.mxu0 %v927
        %968 = vmatpush.bf16.msra.mxu0 %v925
        %969 = vmatmul.bf16.gmra.mxu0 %v621
        %v970 = vpop.f32.mrf.mxu0
        %v971 = vadd.f32 0.0, %v970
        %v972 = vpop.f32.mrf.mxu0
        %v973 = vadd.f32 0.0, %v972
        %974 = vmatmul.bf16.gmra.mxu0 %v624
        %v975 = vpop.f32.mrf.mxu0
        %v976 = vadd.f32 0.0, %v975
        %v977 = vpop.f32.mrf.mxu0
        %v978 = vadd.f32 0.0, %v977
        %979 = vmatmul.bf16.gmra.mxu0 %v627
        %v980 = vpop.f32.mrf.mxu0
        %v981 = vadd.f32 0.0, %v980
        %v982 = vpop.f32.mrf.mxu0
        %v983 = vadd.f32 0.0, %v982
        %984 = vmatmul.bf16.gmra.mxu0 %v630
        %v985 = vpop.f32.mrf.mxu0
        %v986 = vadd.f32 0.0, %v985
        %v987 = vpop.f32.mrf.mxu0
        %v988 = vadd.f32 0.0, %v987
        %989 = vdwg.mxu0
        %v990 = vstv %s320
        %v991 = vmul.f32 %v990, %v942
        %v992 = vmul.f32 %v990, %v944
        %v993 = vmul.f32 %v990, %v947
        %v994 = vmul.f32 %v990, %v949
        %v995 = vmul.f32 %v990, %v952
        %v996 = vmul.f32 %v990, %v954
        %v997 = vmul.f32 %v990, %v957
        %v998 = vmul.f32 %v990, %v959
        %v999 = vadd.f32 %v916, %v991
        %v1000 = vadd.f32 %v917, %v992
        %v1001 = vadd.f32 %v918, %v993
        %v1002 = vadd.f32 %v919, %v994
        %v1003 = vadd.f32 %v920, %v995
        %v1004 = vadd.f32 %v921, %v996
        %v1005 = vadd.f32 %v922, %v997
        %v1006 = vadd.f32 %v923, %v998
        %v1007 = vstv %s321
        %v1008 = vmul.f32 %v1007, %v971
        %v1009 = vmul.f32 %v1007, %v973
        %v1010 = vmul.f32 %v1007, %v976
        %v1011 = vmul.f32 %v1007, %v978
        %v1012 = vmul.f32 %v1007, %v981
        %v1013 = vmul.f32 %v1007, %v983
        %v1014 = vmul.f32 %v1007, %v986
        %v1015 = vmul.f32 %v1007, %v988
        %v1016 = vadd.f32 %v999, %v1008
        %v1017 = vadd.f32 %v1000, %v1009
        %v1018 = vadd.f32 %v1001, %v1010
        %v1019 = vadd.f32 %v1002, %v1011
        %v1020 = vadd.f32 %v1003, %v1012
        %v1021 = vadd.f32 %v1004, %v1013
        %v1022 = vadd.f32 %v1005, %v1014
        %v1023 = vadd.f32 %v1006, %v1015
        %v1024 = vpack.c.bf16 %v944, %v942
        %v1025 = vpack.c.bf16 %v949, %v947
        %v1026 = vpack.c.bf16 %v954, %v952
        %v1027 = vpack.c.bf16 %v959, %v957
        %1028 = vmatpush.bf16.msra.mxu0 0
        %1029 = vmatpush.bf16.msra.mxu0 0
        %1030 = vmatpush.bf16.msra.mxu0 0
        %1031 = vmatpush.bf16.msra.mxu0 0
        %1032 = vmatpush.bf16.msra.mxu0 %v1027
        %1033 = vmatpush.bf16.msra.mxu0 %v1026
        %1034 = vmatpush.bf16.msra.mxu0 %v1025
        %1035 = vmatpush.bf16.msra.mxu0 %v1024
        %1036 = vmatmul.bf16.gmra.mxu0 %v621
        %v1037 = vpop.f32.mrf.mxu0
        %v1038 = vadd.f32 0.0, %v1037
        %v1039 = vpop.f32.mrf.mxu0
        %v1040 = vadd.f32 0.0, %v1039
        %1041 = vmatmul.bf16.gmra.mxu0 %v624
        %v1042 = vpop.f32.mrf.mxu0
        %v1043 = vadd.f32 0.0, %v1042
        %v1044 = vpop.f32.mrf.mxu0
        %v1045 = vadd.f32 0.0, %v1044
        %1046 = vmatmul.bf16.gmra.mxu0 %v627
        %v1047 = vpop.f32.mrf.mxu0
        %v1048 = vadd.f32 0.0, %v1047
        %v1049 = vpop.f32.mrf.mxu0
        %v1050 = vadd.f32 0.0, %v1049
        %1051 = vmatmul.bf16.gmra.mxu0 %v630
        %v1052 = vpop.f32.mrf.mxu0
        %v1053 = vadd.f32 0.0, %v1052
        %v1054 = vpop.f32.mrf.mxu0
        %v1055 = vadd.f32 0.0, %v1054
        %1056 = vdwg.mxu0
        %v1057 = vstv %s322
        %v1058 = vmul.f32 %v1057, %v1038
        %v1059 = vmul.f32 %v1057, %v1040
        %v1060 = vmul.f32 %v1057, %v1043
        %v1061 = vmul.f32 %v1057, %v1045
        %v1062 = vmul.f32 %v1057, %v1048
        %v1063 = vmul.f32 %v1057, %v1050
        %v1064 = vmul.f32 %v1057, %v1053
        %v1065 = vmul.f32 %v1057, %v1055
        %v1066 = vadd.f32 %v1016, %v1058
        %v1067 = vadd.f32 %v1017, %v1059
        %v1068 = vadd.f32 %v1018, %v1060
        %v1069 = vadd.f32 %v1019, %v1061
        %v1070 = vadd.f32 %v1020, %v1062
        %v1071 = vadd.f32 %v1021, %v1063
        %v1072 = vadd.f32 %v1022, %v1064
        %v1073 = vadd.f32 %v1023, %v1065
        %1074 = vst [vmem:[%s300] sm:$0xff] %v1066
        %1075 = vst [vmem:[%s300 + $0x8] sm:$0xff] %v1067
        %1076 = vst [vmem:[%s300 + $0x10] sm:$0xff] %v1068
        %1077 = vst [vmem:[%s300 + $0x18] sm:$0xff] %v1069
        %1078 = vst [vmem:[%s300 + $0x20] sm:$0xff] %v1070
        %1079 = vst [vmem:[%s300 + $0x28] sm:$0xff] %v1071
        %1080 = vst [vmem:[%s300 + $0x30] sm:$0xff] %v1072
        %1081 = vst [vmem:[%s300 + $0x38] sm:$0xff] %v1073
        %s1082 = sand.u32 %s187, 1
        %s1083 = scalar_lea.sflag [#allocation3], %s1082
        %s1084 = sand.u32 %s187, 1
        %s1085 = smul.addr %s1084, 64
        %s1086 = scalar_lea.vmem [#allocation5], %s1085
        // Predicated region
        $region53: #{tpu_custom_call.1} parent=47 // pred_check
          %p1087 = pneg %p197
        $region54: #{tpu_custom_call.1} parent=47 // pred_check_branch
          %1089 = sbr.rel (%p1087) target = $region56
        $region55: #{tpu_custom_call.1} parent=47 // pred_region
          %1091 = vsyncadd %s1083, 0
          %s1092 = smul.addr %s22, 8
          %s1093 = smul.addr %s1092, 8
          %s1094 = scalar_lea.hbm %s7, %s1093
          %s1095 = sshll.u32 %s1086, 4
          %s1096 = int_to_ptr.vmem [resolvable:$true] %s1095
          %s1097 = sshll.u32 %s1094, 4
          %s1098 = int_to_ptr.hbm [resolvable:$true] %s1097
          %1103 = dma.vmem_to_hbm [thread:$0]  %s1096, 1024, %s1098, %s1083, 128, 128, 8
        $region56: #{tpu_custom_call.1} parent=47 // pred_fallthru
          _
      $region48: #{tpu_custom_call.1} parent=5 // pred_fallthru
        _
      %p1104 = scmp.le.s32.totalorder 2, %s17
      // Predicated region
      $region57: #{tpu_custom_call.1} parent=5 // pred_check
        %p1105 = pneg %p1104
      $region58: #{tpu_custom_call.1} parent=5 // pred_check_branch
        %1107 = sbr.rel (%p1105) target = $region60
      $region59: #{tpu_custom_call.1} parent=5 // pred_region
        %s1108 = ssub.s32 %s17, 2
        // Predicated region
        $region61: #{tpu_custom_call.1} parent=59 // pred_check
          %p1109 = pneg %p203
        $region62: #{tpu_custom_call.1} parent=59 // pred_check_branch
          %1111 = sbr.rel (%p1109) target = $region64
        $region63: #{tpu_custom_call.1} parent=59 // pred_region
          %s1112 = sand.u32 %s188, 1
          %s1113 = scalar_lea.sflag [#allocation3], %s1112
          %s1114 = sand.u32 %s188, 1
          %s1115 = smul.addr %s1114, 64
          %s1116 = scalar_lea.vmem [#allocation5], %s1115
          %1118 = dma.done %s1113, 1024
        $region64: #{tpu_custom_call.1} parent=59 // pred_fallthru
          _
      $region60: #{tpu_custom_call.1} parent=5 // pred_fallthru
        _
    $region6: #{tpu_custom_call.1} parent=1 // loop_footer
      %s21 = sadd.s32 1, %s17
    $region7: #{tpu_custom_call.1} parent=1 // loop_footer_branch
      %16 = sbr.rel target = $region3
    $region8: #{tpu_custom_call.1} parent=1 // loop_exit
      _
    %1119 = vsyncpa [#allocation3], 1
    %s1120 = scalar_lea.sflag [#allocation3], 1
    %1121 = vsyncpa %s1120, 1
    %1122 = vsyncpa [#allocation4], 1
    %s1123 = scalar_lea.sflag [#allocation4], 1
    %1124 = vsyncpa %s1123, 1

</llo_original>
